<compile_context>
chip_gen: v5e
topology: v5e:2x2
jax: 0.10.0
libtpu: 0.0.40
codegen_flags: <defaults>
</compile_context>

<pallas_src>
import functools
from typing import NamedTuple

import jax
import jax.numpy as jnp
from jax.experimental import pallas as pl
from jax.experimental.pallas import tpu as pltpu

_MIB = 1 << 20


def _round_up(x: int, m: int) -> int:
    return ((x + m - 1) // m) * m


def _sublane_multiple(dtype) -> int:
    # f32 -> 8, bf16 -> 16, int8/fp8 -> 32 (sub-32-bit dtypes pack sublanes).
    return max(8, 32 // jnp.dtype(dtype).itemsize)


@functools.lru_cache(maxsize=None)
def _tpu_generation():
    """Best-effort TPU generation + VMEM capacity (None if unknown)."""
    kind = ""
    try:
        kind = jax.devices()[0].device_kind.lower()
    except Exception:  # pragma: no cover
        pass
    if ("v5 lite" in kind) or ("v5e" in kind) or ("v5lite" in kind):
        gen = "v5e"
    elif "v6" in kind:
        gen = "v6e"
    elif ("v7" in kind) or ("tpu7" in kind):
        gen = "v7x"
    else:
        gen = "other"
    vmem_cap = None
    try:
        vmem_cap = int(getattr(pltpu.get_tpu_info(), "vmem_capacity_bytes", 0)) or None
    except Exception:  # pragma: no cover
        vmem_cap = None
    return gen, vmem_cap


def _vmem_budget(gen: str, vmem_cap) -> int:
    if vmem_cap:
        # Leave headroom for Mosaic internal scratch / semaphores.
        return int(min(vmem_cap - 12 * _MIB, 0.85 * vmem_cap))
    # v5e/v6e physically have 128 MiB per TC; v7x only 64 MiB.
    return {"v5e": 100 * _MIB, "v6e": 100 * _MIB, "v7x": 52 * _MIB}.get(gen, 64 * _MIB)


def _vmem_need_bytes(TB, TK, Hp, Lp, x_it, w_it, out_it, resident) -> int:
    w1_bufs = 1 if resident else 2          # resident W1 is single-buffered
    return (2 * TB * TK * x_it              # x tile (double-buffered)
            + w1_bufs * TK * Hp * w_it      # W1 block(s)
            + Hp * w_it                     # b1 (single-buffered)
            + Hp * Lp * w_it                # W2 (single-buffered, resident)
            + Lp * w_it                     # b2
            + 2 * TB * Lp * out_it          # output tile
            + TB * Hp * 4)                  # f32 accumulator scratch


class HeadParams(NamedTuple):
    w1: jax.Array       # [Hp, Hp]  (stored [in, out])
    b1: jax.Array       # [1, Hp]
    w2: jax.Array       # [Hp, Lp]
    b2: jax.Array       # [1, Lp]
    hidden: int         # original H
    labels: int         # original L
    block_k: int        # TK (== Hp when resident)
    resident: bool      # W1 fully VMEM-resident


def prepare_head_params(w1, b1, w2, b2, *, block_k: int = 1024) -> HeadParams:
    """One-time weight preparation (padding / layout), hoisted off the per-call
    path.  w1: [H, H]; b1: [H]; w2: [H, L]; b2: [L] (all stored [in, out])."""
    H = int(w1.shape[0])
    L = int(w2.shape[1])
    assert w1.shape == (H, H) and b1.shape == (H,)
    assert w2.shape == (H, L) and b2.shape == (L,)
    block_k = _round_up(max(int(block_k), 128), 128)

    gen, cap = _tpu_generation()
    budget = _vmem_budget(gen, cap)
    w_it = jnp.dtype(w1.dtype).itemsize

    # Lane-dense output: pad num_labels up to a multiple of 128 (done once here,
    # so the per-call path never pays the pad write+read).
    Lp = _round_up(L, 128)

    # Keep W1 fully resident (TK == Hp, constant index map) whenever it fits the
    # per-generation VMEM budget (estimated with a nominal 512-row batch tile).
    nominal_tb = 512
    resident = _vmem_need_bytes(nominal_tb, H, H, Lp, w_it, w_it, w_it, True) <= budget
    if resident:
        Hp, TK = H, H            # full-array blocks -> no H padding needed at all
    else:
        # K-tiled first matmul: pad H only to a 128 multiple and pick TK near
        # block_k so Hp is not inflated (old code rounded Hp up to TK=512).
        Hp0 = _round_up(H, 128)
        n_k = -(-Hp0 // block_k)
        TK = -(-(Hp0 // 128) // n_k) * 128
        Hp = _round_up(Hp0, TK)

    def _pad(a, shape):
        if a.shape == tuple(shape):
            return a                # already kernel-friendly: no copy, no HBM traffic
        out = jnp.zeros(shape, a.dtype)
        return out.at[tuple(slice(0, s) for s in a.shape)].set(a)

    # Zero padding is semantically inert: padded hidden columns give
    # tanh(0 + 0) = 0 and multiply zero W2 rows.
    w1_p = _pad(w1, (Hp, Hp))
    b1_p = _pad(b1.reshape(1, H), (1, Hp))
    w2_p = _pad(w2, (Hp, Lp))
    b2_p = _pad(b2.reshape(1, L), (1, Lp))
    return HeadParams(w1_p, b1_p, w2_p, b2_p, H, L, TK, resident)


def _head_kernel(x_ref, w1_ref, b1_ref, w2_ref, b2_ref, out_ref, h_acc):
    # grid = (batch_tiles, k_tiles); k is the reduction axis of the first matmul
    # and MUST stay the innermost ("arbitrary") grid axis for h_acc correctness.
    #   x_ref:  [TB, TK]   w1_ref: [TK, Hp]   b1_ref: [1, Hp]
    #   w2_ref: [Hp, Lp]   b2_ref: [1, Lp]    out_ref: [TB, Lp]
    #   h_acc:  [TB, Hp] f32 scratch accumulator
    k = pl.program_id(1)

    @pl.when(k == 0)
    def _():
        h_acc[...] = jnp.zeros_like(h_acc)

    # First matmul: accumulate x @ W1 in f32 on the MXU (no operand upcast).
    h_acc[...] += jnp.dot(x_ref[...], w1_ref[...],
                          preferred_element_type=jnp.float32)

    @pl.when(k == pl.num_programs(1) - 1)
    def _():
        h = jnp.tanh(h_acc[...] + b1_ref[...].astype(jnp.float32))
        w2 = w2_ref[...]
        o = jnp.dot(h.astype(w2.dtype), w2,
                    preferred_element_type=jnp.float32)
        o = o + b2_ref[...].astype(jnp.float32)
        out_ref[...] = o.astype(out_ref.dtype)


def tex_classification_head(features, params: HeadParams):
    """Eval-mode forward of TexClassificationHead.

    features: [B, H] -> [B, num_labels].  Dropout is identity at inference.
    """
    B, H = features.shape
    assert H == params.hidden, "feature dim does not match prepared params"
    L = params.labels
    Hp = params.w1.shape[0]
    Lp = params.w2.shape[1]
    TK = params.block_k
    resident = params.resident
    out_dtype = features.dtype

    gen, cap = _tpu_generation()
    budget = _vmem_budget(gen, cap)
    x_it = jnp.dtype(features.dtype).itemsize
    w_it = jnp.dtype(params.w1.dtype).itemsize
    out_it = jnp.dtype(out_dtype).itemsize

    # ---------------- batch tile (generation-aware) ----------------
    sub = _sublane_multiple(features.dtype)
    if resident:
        tb_target = 512                       # W1 resident: compute-bound already
    else:
        # W1 slabs are re-streamed per batch tile: TB must clear the per-chip
        # flops/HBM-BW roofline (~240 rows v5e, ~680 v6e, ~620/TC v7x).
        tb_target = {"v5e": 256, "v6e": 1024, "v7x": 768}.get(gen, 768)
    if gen == "v7x" and B > 256:
        # 2 TensorCores per chip: keep grid[0] >= 2 so the "parallel" batch
        # axis actually shards across both cores.
        tb_target = min(tb_target, max(256, _round_up(-(-B // 2), 128)))
    TB = min(_round_up(B, sub), tb_target)
    # Shrink TB if the per-step working set overflows the VMEM budget.
    while TB > sub and _vmem_need_bytes(TB, TK, Hp, Lp, x_it, w_it, out_it,
                                        resident) > budget:
        TB = max(sub, _round_up(TB // 2, sub))
    Bp = _round_up(B, TB)

    # Pad activations only if actually required (batch remainder / K-tiled Hp).
    # Padded batch rows produce tanh(b1) garbage that is sliced away below.
    if (Bp, Hp) != (B, H):
        x_p = jnp.zeros((Bp, Hp), features.dtype).at[:B, :H].set(features)
    else:
        x_p = features

    grid = (Bp // TB, Hp // TK)

    # ---------------- BlockSpecs ----------------
    def _const_spec(shape):
        # Constant-index-map block: fetched once, never changes -> a single
        # VMEM buffer is enough (skip the default double-buffering).
        try:
            return pl.BlockSpec(shape, lambda i, k: (0, 0),
                                pipeline_mode=pl.Buffered(1))
        except (AttributeError, TypeError):   # older jax without pipeline_mode
            return pl.BlockSpec(shape, lambda i, k: (0, 0))

    if resident:
        w1_spec = _const_spec((TK, Hp))               # whole W1, streamed once
    else:
        w1_spec = pl.BlockSpec((TK, Hp), lambda i, k: (k, 0))   # K-slab, pipelined

    in_specs = [
        pl.BlockSpec((TB, TK), lambda i, k: (i, k)),  # x tile
        w1_spec,                                      # W1
        _const_spec((1, Hp)),                         # b1 (resident)
        _const_spec((Hp, Lp)),                        # W2 (resident)
        _const_spec((1, Lp)),                         # b2 (resident)
    ]

    # ---------------- VMEM limit & cost estimate ----------------
    need = _vmem_need_bytes(TB, TK, Hp, Lp, x_it, w_it, out_it, resident)
    vmem_limit = int(min(max(need + 4 * _MIB, 32 * _MIB), budget))

    w1_passes = 1 if resident else (Bp // TB)         # actual W1 HBM traffic
    cost = pl.CostEstimate(
        flops=2 * Bp * Hp * Hp + 2 * Bp * Hp * Lp,
        transcendentals=Bp * Hp,
        bytes_accessed=(Bp * Hp * x_it
                        + w1_passes * Hp * Hp * w_it
                        + Hp * w_it
                        + Hp * Lp * w_it
                        + Lp * w_it
                        + Bp * Lp * out_it))

    out_p = pl.pallas_call(
        _head_kernel,
        out_shape=jax.ShapeDtypeStruct((Bp, Lp), out_dtype),
        grid_spec=pltpu.PrefetchScalarGridSpec(
            num_scalar_prefetch=0,
            grid=grid,
            in_specs=in_specs,
            out_specs=pl.BlockSpec((TB, Lp), lambda i, k: (i, 0)),
            scratch_shapes=[pltpu.VMEM((TB, Hp), jnp.float32)],
        ),
        compiler_params=pltpu.CompilerParams(
            dimension_semantics=("parallel", "arbitrary"),
            vmem_limit_bytes=vmem_limit),
        cost_estimate=cost,
    )(x_p, params.w1, params.b1, params.w2, params.b2)

    if (Bp, Lp) != (B, L):
        return out_p[:B, :L]
    return out_p


def tex_classification_head_from_weights(features, w1, b1, w2, b2):
    """Convenience one-shot wrapper.  Prefer prepare_head_params() once + the
    prepared path in real use (avoids per-call weight padding traffic)."""
    return tex_classification_head(features, prepare_head_params(w1, b1, w2, b2))


def _reference(features, w1, b1, w2, b2):
    h = jnp.tanh(features @ w1 + b1)
    return h @ w2 + b2


if __name__ == "__main__":
    key = jax.random.PRNGKey(0)
    B, H, L = 8, 32, 4  # batch, hidden_size, num_labels

    k_x, k_w1, k_b1, k_w2, k_b2 = jax.random.split(key, 5)
    features = jax.random.normal(k_x, (B, H), dtype=jnp.float32)
    # Deterministic synthetic params, stored [in, out] (transposed vs. PyTorch).
    w1 = jax.random.normal(k_w1, (H, H), dtype=jnp.float32) * 0.05
    b1 = jax.random.normal(k_b1, (H,), dtype=jnp.float32) * 0.05
    w2 = jax.random.normal(k_w2, (H, L), dtype=jnp.float32) * 0.05
    b2 = jax.random.normal(k_b2, (L,), dtype=jnp.float32) * 0.05

    params = prepare_head_params(w1, b1, w2, b2)   # one-time weight prep

    out = tex_classification_head(features, params)
    jax.block_until_ready(out)
    ref = _reference(features, w1, b1, w2, b2)
    assert out.shape == (B, L)
    assert jnp.allclose(out, ref, atol=1e-5, rtol=1e-5)

    # Ragged batch: exercises batch padding + output slice-back.
    out2 = tex_classification_head(features[:5], params)
    jax.block_until_ready(out2)
    assert out2.shape == (5, L)
    assert jnp.allclose(out2, ref[:5], atol=1e-5, rtol=1e-5)

    print("KERNEL_OK")
</pallas_src>

<mosaic_0001>
module attributes {stable_mosaic.version = 11 : i64} {
  func.func @_head_kernel(%arg0: i32, %arg1: i32, %arg2: memref<8x32xf32, #tpu.memory_space<vmem>>, %arg3: memref<32x32xf32, #tpu.memory_space<vmem>>, %arg4: memref<1x32xf32, #tpu.memory_space<vmem>>, %arg5: memref<32x128xf32, #tpu.memory_space<vmem>>, %arg6: memref<1x128xf32, #tpu.memory_space<vmem>>, %arg7: memref<8x128xf32, #tpu.memory_space<vmem>>, %arg8: memref<8x32xf32, #tpu.memory_space<vmem>>) attributes {dimension_semantics = [#tpu.dimension_semantics<parallel>, #tpu.dimension_semantics<arbitrary>], iteration_bounds = array<i64: 1, 1>, scalar_prefetch = 0 : i64, scratch_operands = 1 : i64, tpu.core_type = #tpu.core_type<tc>, window_params = [{transform_indices = @transform_0, window_bounds = array<i64: 8, 32>}, {pipeline_mode = #tpu.pipeline_mode<synchronous>, transform_indices = @transform_1, window_bounds = array<i64: 32, 32>}, {pipeline_mode = #tpu.pipeline_mode<synchronous>, transform_indices = @transform_2, window_bounds = array<i64: 1, 32>}, {pipeline_mode = #tpu.pipeline_mode<synchronous>, transform_indices = @transform_3, window_bounds = array<i64: 32, 128>}, {pipeline_mode = #tpu.pipeline_mode<synchronous>, transform_indices = @transform_4, window_bounds = array<i64: 1, 128>}, {transform_indices = @transform_5, window_bounds = array<i64: 8, 128>}]} {
    %c0_i32 = arith.constant 0 : i32
    %0 = arith.cmpi eq, %arg1, %c0_i32 : i32
    %1 = arith.extui %0 : i1 to i32
    %c0_i32_0 = arith.constant 0 : i32
    %2 = arith.cmpi ne, %1, %c0_i32_0 : i32
    scf.if %2 {
      %cst_10 = arith.constant 0.000000e+00 : f32
      %12 = vector.broadcast %cst_10 : f32 to vector<8x32xf32>
      %c0_11 = arith.constant 0 : index
      %c0_12 = arith.constant 0 : index
      %13 = vector.load %arg8[%c0_11, %c0_12] : memref<8x32xf32, #tpu.memory_space<vmem>>, vector<8x32xf32>
      tpu.vector_store %arg8[%c0_11, %c0_12], %12 {strides = array<i32>} : memref<8x32xf32, #tpu.memory_space<vmem>>, vector<8x32xf32>,
    } else {
    }
    %c0 = arith.constant 0 : index
    %c0_1 = arith.constant 0 : index
    %3 = vector.load %arg8[%c0, %c0_1] : memref<8x32xf32, #tpu.memory_space<vmem>>, vector<8x32xf32>
    %c0_2 = arith.constant 0 : index
    %c0_3 = arith.constant 0 : index
    %4 = vector.load %arg2[%c0_2, %c0_3] : memref<8x32xf32, #tpu.memory_space<vmem>>, vector<8x32xf32>
    %c0_4 = arith.constant 0 : index
    %c0_5 = arith.constant 0 : index
    %5 = vector.load %arg3[%c0_4, %c0_5] : memref<32x32xf32, #tpu.memory_space<vmem>>, vector<32x32xf32>
    %cst = arith.constant dense<0.000000e+00> : vector<8x32xf32>
    %6 = tpu.matmul %4, %5, %cst {dimension_numbers = #tpu.dot_dimension_numbers<[1], [0], [0], [1], [0, 0, 1, 1], [], []>} : vector<8x32xf32>, vector<32x32xf32>, vector<8x32xf32> -> vector<8x32xf32>
    %7 = arith.addf %3, %6 : vector<8x32xf32>
    %c0_6 = arith.constant 0 : index
    %c0_7 = arith.constant 0 : index
    %8 = vector.load %arg8[%c0_6, %c0_7] : memref<8x32xf32, #tpu.memory_space<vmem>>, vector<8x32xf32>
    tpu.vector_store %arg8[%c0_6, %c0_7], %7 {strides = array<i32>} : memref<8x32xf32, #tpu.memory_space<vmem>>, vector<8x32xf32>,
    %c0_i32_8 = arith.constant 0 : i32
    %9 = arith.cmpi eq, %arg1, %c0_i32_8 : i32
    %10 = arith.extui %9 : i1 to i32
    %c0_i32_9 = arith.constant 0 : i32
    %11 = arith.cmpi ne, %10, %c0_i32_9 : i32
    scf.if %11 {
      %c0_10 = arith.constant 0 : index
      %c0_11 = arith.constant 0 : index
      %12 = vector.load %arg8[%c0_10, %c0_11] : memref<8x32xf32, #tpu.memory_space<vmem>>, vector<8x32xf32>
      %c0_12 = arith.constant 0 : index
      %c0_13 = arith.constant 0 : index
      %13 = vector.load %arg4[%c0_12, %c0_13] : memref<1x32xf32, #tpu.memory_space<vmem>>, vector<1x32xf32>
      %14 = vector.broadcast %13 : vector<1x32xf32> to vector<8x32xf32>
      %15 = arith.addf %12, %14 : vector<8x32xf32>
      %16 = math.tanh %15 : vector<8x32xf32>
      %c0_14 = arith.constant 0 : index
      %c0_15 = arith.constant 0 : index
      %17 = vector.load %arg5[%c0_14, %c0_15] : memref<32x128xf32, #tpu.memory_space<vmem>>, vector<32x128xf32>
      %cst_16 = arith.constant dense<0.000000e+00> : vector<8x128xf32>
      %18 = tpu.matmul %16, %17, %cst_16 {dimension_numbers = #tpu.dot_dimension_numbers<[1], [0], [0], [1], [0, 0, 1, 1], [], []>} : vector<8x32xf32>, vector<32x128xf32>, vector<8x128xf32> -> vector<8x128xf32>
      %c0_17 = arith.constant 0 : index
      %c0_18 = arith.constant 0 : index
      %19 = vector.load %arg6[%c0_17, %c0_18] : memref<1x128xf32, #tpu.memory_space<vmem>>, vector<1x128xf32>
      %20 = vector.broadcast %19 : vector<1x128xf32> to vector<8x128xf32>
      %21 = arith.addf %18, %20 : vector<8x128xf32>
      %c0_19 = arith.constant 0 : index
      %c0_20 = arith.constant 0 : index
      %22 = vector.load %arg7[%c0_19, %c0_20] : memref<8x128xf32, #tpu.memory_space<vmem>>, vector<8x128xf32>
      tpu.vector_store %arg7[%c0_19, %c0_20], %21 {strides = array<i32>} : memref<8x128xf32, #tpu.memory_space<vmem>>, vector<8x128xf32>,
    } else {
    }
    return
  }
  func.func @transform_0(%arg0: i32, %arg1: i32) -> (i32, i32) {
    %c0_i32 = arith.constant 0 : i32
    return %arg0, %arg1 : i32, i32
  }
  func.func @transform_1(%arg0: i32, %arg1: i32) -> (i32, i32) {
    %c0_i32 = arith.constant 0 : i32
    %c0_i32_0 = arith.constant 0 : i32
    %c0_i32_1 = arith.constant 0 : i32
    return %c0_i32, %c0_i32_0 : i32, i32
  }
  func.func @transform_2(%arg0: i32, %arg1: i32) -> (i32, i32) {
    %c0_i32 = arith.constant 0 : i32
    %c0_i32_0 = arith.constant 0 : i32
    %c0_i32_1 = arith.constant 0 : i32
    return %c0_i32, %c0_i32_0 : i32, i32
  }
  func.func @transform_3(%arg0: i32, %arg1: i32) -> (i32, i32) {
    %c0_i32 = arith.constant 0 : i32
    %c0_i32_0 = arith.constant 0 : i32
    %c0_i32_1 = arith.constant 0 : i32
    return %c0_i32, %c0_i32_0 : i32, i32
  }
  func.func @transform_4(%arg0: i32, %arg1: i32) -> (i32, i32) {
    %c0_i32 = arith.constant 0 : i32
    %c0_i32_0 = arith.constant 0 : i32
    %c0_i32_1 = arith.constant 0 : i32
    return %c0_i32, %c0_i32_0 : i32, i32
  }
  func.func @transform_5(%arg0: i32, %arg1: i32) -> (i32, i32) {
    %c0_i32 = arith.constant 0 : i32
    %c0_i32_0 = arith.constant 0 : i32
    return %arg0, %c0_i32 : i32, i32
  }
}

</mosaic_0001>

<llo_original>
// kernel: tpu_custom_call.1
$region0: #{tpu_custom_call.1}
  #allocation0 [shape = 'u32[]', space=smem, size = 0x4, offset = 0x4, fixed_abs, tag = 'smem constant byte address 0x4 - core index']
  #allocation1 [shape = 'u32[72,128]{1,0:T(1,128)}', space=vmem, size = 0x9000, scoped, tag = 'internal scratch']
  #allocation2 [shape = 'f32[8,32]{1,0:T(8,128)}', space=vmem, size = 0x1000, scoped, tag = 'scratch operand']
  %s0 = inlined_call_operand.hbm [shape: f32[8,32], index: 0, kind: input, shape index: {}]
  %s1 = inlined_call_operand.hbm [shape: f32[32,32], index: 1, kind: input, shape index: {}]
  %s2 = inlined_call_operand.vmem [shape: f32[1,32], index: 2, kind: input, shape index: {}]
  %s3 = inlined_call_operand.hbm [shape: f32[32,128], index: 3, kind: input, shape index: {}]
  %s4 = inlined_call_operand.vmem [shape: f32[1,128], index: 4, kind: input, shape index: {}]
  %s5 = inlined_call_operand.hbm [shape: f32[8,128], index: 5, kind: output, shape index: {}]
  %s6 = sld [smem:[#allocation0]]
  $region50: #{tpu_custom_call.1} parent=0
    _
  %s8 = ssub.s32 1, %s6
  %s9 = scalar_select 0, %s8, %s6
  $region1: #{tpu_custom_call.1} parent=0
    #allocation3 [shape = 'u8[4096]{0}', space=vmem, size = 0x1000, scoped, tag = 'input window, operand 0, single buffered']
    #allocation4 [shape = 's32[1]{0}', space=sflag, size = 0x4, scoped, tag = 'scoped memory for tpu_custom_call.1']
    #allocation5 [shape = 's32[1]{0}', space=sflag, size = 0x4, scoped, tag = 'scoped memory for tpu_custom_call.1']
    #allocation6 [shape = 'u8[16384]{0}', space=vmem, size = 0x4000, scoped, tag = 'input window, operand 1, single buffered']
    #allocation7 [shape = 's32[1]{0}', space=sflag, size = 0x4, scoped, tag = 'scoped memory for tpu_custom_call.1']
    #allocation8 [shape = 'u8[16384]{0}', space=vmem, size = 0x4000, scoped, tag = 'input window, operand 3, single buffered']
    #allocation9 [shape = 'u8[4096]{0}', space=vmem, size = 0x1000, scoped, tag = 'output window, operand 0, single buffered']
    %10 = vsyncpa [#allocation4], 0
    %11 = vsyncpa [#allocation7], 0
    %12 = vsyncpa [#allocation5], 0
    // Predicated region
    $region2: #{tpu_custom_call.1} parent=1 // pred_check
      _
    $region3: #{tpu_custom_call.1} parent=1 // pred_check_branch
      %14 = sbr.rel (0) target = $region5
    $region4: #{tpu_custom_call.1} parent=1 // pred_region
      %16 = vsyncadd [#allocation4], 0
      %s18 = sshll.u32 %s0, 4
      %s19 = int_to_ptr.hbm [resolvable:$true] %s18
      %s20 = sshll.u32 [#allocation3], 4
      %s21 = int_to_ptr.vmem [resolvable:$true] %s20
      %23 = dma.hbm_to_vmem [thread:$0]  %s19, 128, %s21, [#allocation4]
    $region5: #{tpu_custom_call.1} parent=1 // pred_fallthru
      _
    // Predicated region
    $region6: #{tpu_custom_call.1} parent=1 // pred_check
      _
    $region7: #{tpu_custom_call.1} parent=1 // pred_check_branch
      %25 = sbr.rel (0) target = $region9
    $region8: #{tpu_custom_call.1} parent=1 // pred_region
      %27 = vsyncadd [#allocation7], 0
      %s28 = sshll.u32 %s1, 4
      %s29 = int_to_ptr.hbm [resolvable:$true] %s28
      %s30 = sshll.u32 [#allocation6], 4
      %s31 = int_to_ptr.vmem [resolvable:$true] %s30
      %36 = dma.hbm_to_vmem [thread:$0]  %s29, 512, %s31, [#allocation7], 128, 128, 8
    $region9: #{tpu_custom_call.1} parent=1 // pred_fallthru
      _
    // Predicated region
    $region10: #{tpu_custom_call.1} parent=1 // pred_check
      _
    $region11: #{tpu_custom_call.1} parent=1 // pred_check_branch
      %38 = sbr.rel (0) target = $region13
    $region12: #{tpu_custom_call.1} parent=1 // pred_region
      _
    $region13: #{tpu_custom_call.1} parent=1 // pred_fallthru
      _
    // Predicated region
    $region14: #{tpu_custom_call.1} parent=1 // pred_check
      _
    $region15: #{tpu_custom_call.1} parent=1 // pred_check_branch
      %40 = sbr.rel (0) target = $region17
    $region16: #{tpu_custom_call.1} parent=1 // pred_region
      %42 = vsyncadd [#allocation7], 0
      %s43 = sshll.u32 %s3, 4
      %s44 = int_to_ptr.hbm [resolvable:$true] %s43
      %s45 = sshll.u32 [#allocation8], 4
      %s46 = int_to_ptr.vmem [resolvable:$true] %s45
      %51 = dma.hbm_to_vmem [thread:$0]  %s44, 512, %s46, [#allocation7], 128, 128, 8
    $region17: #{tpu_custom_call.1} parent=1 // pred_fallthru
      _
    // Predicated region
    $region18: #{tpu_custom_call.1} parent=1 // pred_check
      _
    $region19: #{tpu_custom_call.1} parent=1 // pred_check_branch
      %53 = sbr.rel (0) target = $region21
    $region20: #{tpu_custom_call.1} parent=1 // pred_region
      _
    $region21: #{tpu_custom_call.1} parent=1 // pred_fallthru
      _
    // Predicated region
    $region22: #{tpu_custom_call.1} parent=1 // pred_check
      _
    $region23: #{tpu_custom_call.1} parent=1 // pred_check_branch
      %55 = sbr.rel (0) target = $region25
    $region24: #{tpu_custom_call.1} parent=1 // pred_region
      %57 = dma.done [#allocation4], 128
    $region25: #{tpu_custom_call.1} parent=1 // pred_fallthru
      _
    // Predicated region
    $region26: #{tpu_custom_call.1} parent=1 // pred_check
      _
    $region27: #{tpu_custom_call.1} parent=1 // pred_check_branch
      %59 = sbr.rel (0) target = $region29
    $region28: #{tpu_custom_call.1} parent=1 // pred_region
      %61 = dma.done [#allocation7], 512
    $region29: #{tpu_custom_call.1} parent=1 // pred_fallthru
      _
    // Predicated region
    $region30: #{tpu_custom_call.1} parent=1 // pred_check
      _
    $region31: #{tpu_custom_call.1} parent=1 // pred_check_branch
      %63 = sbr.rel (0) target = $region33
    $region32: #{tpu_custom_call.1} parent=1 // pred_region
      %65 = dma.done [#allocation7], 512
    $region33: #{tpu_custom_call.1} parent=1 // pred_fallthru
      _
    %p66 = scmp.eq.s32.totalorder 0, 0
    // Predicated region
    $region34: #{tpu_custom_call.1} parent=1 // pred_check
      %p67 = pneg %p66
    $region35: #{tpu_custom_call.1} parent=1 // pred_check_branch
      %69 = sbr.rel (%p67) target = $region37
    $region36: #{tpu_custom_call.1} parent=1 // pred_region
      %vm70 = vcmask 261120
      %71 = vst.msk [vmem:[#allocation2] sm:$0xff] %vm70, 0.0
    $region37: #{tpu_custom_call.1} parent=1 // pred_fallthru
      _
    %v72 = vld [vmem:[#allocation2] sm:$0xff]
    %v73 = vld [vmem:[#allocation3] sm:$0xff]
    %v74 = vld [vmem:[#allocation6] sm:$0xff]
    %v75 = vld [vmem:[#allocation6 + $0x8] sm:$0xff]
    %v76 = vld [vmem:[#allocation6 + $0x10] sm:$0xff]
    %v77 = vld [vmem:[#allocation6 + $0x18] sm:$0xff]
    %vm78 = vcmask 261120
    %v80 = vsel %vm78, %v73, 0
    %82 = vmatpush.msra.mxu0 0.0
    %83 = vmatpush.msra.mxu0 0.0
    %84 = vmatpush.msra.mxu0 0.0
    %85 = vmatpush.msra.mxu0 0.0
    %86 = vmatpush.msra.mxu0 0.0
    %87 = vmatpush.msra.mxu0 0.0
    %88 = vmatpush.msra.mxu0 0.0
    %89 = vmatpush.msra.mxu0 0.0
    %90 = vmatpush.msra.mxu0 0.0
    %91 = vmatpush.msra.mxu0 0.0
    %92 = vmatpush.msra.mxu0 0.0
    %93 = vmatpush.msra.mxu0 0.0
    %94 = vmatpush.msra.mxu0 %v77
    %95 = vmatpush.msra.mxu0 %v76
    %96 = vmatpush.msra.mxu0 %v75
    %97 = vmatpush.msra.mxu0 %v74
    %98 = vmatmul.f32.gmra.mxu0 %v80
    %v99 = vpop.f32.mrf.mxu0
    %v100 = vadd.f32 0.0, %v99
    %101 = vdwg.mxu0
    %v102 = vadd.f32 %v72, %v100
    %103 = vst.msk [vmem:[#allocation2] sm:$0xff] %vm78, %v102
    // Predicated region
    $region38: #{tpu_custom_call.1} parent=1 // pred_check
      %p104 = pneg %p66
    $region39: #{tpu_custom_call.1} parent=1 // pred_check_branch
      %106 = sbr.rel (%p104) target = $region41
    $region40: #{tpu_custom_call.1} parent=1 // pred_region
      %v107 = vld [vmem:[#allocation2] sm:$0xff]
      %v108 = vld [vmem:[%s2] sm:$0x1]
      %v110 = vperm.slane %v108, 0
      %v112 = vadd.f32 %v107, %v110
      %v113 = vtanh.pop %v112
      %v114 = vld [vmem:[#allocation8] sm:$0xff]
      %v115 = vld [vmem:[#allocation8 + $0x8] sm:$0xff]
      %v116 = vld [vmem:[#allocation8 + $0x10] sm:$0xff]
      %v117 = vld [vmem:[#allocation8 + $0x18] sm:$0xff]
      %v118 = vld [vmem:[%s4] sm:$0x1]
      %v120 = vperm.slane %v118, 0
      %v123 = vsel %vm78, %v113, 0
      %125 = vmatpush.msra.mxu0 0.0
      %126 = vmatpush.msra.mxu0 0.0
      %127 = vmatpush.msra.mxu0 0.0
      %128 = vmatpush.msra.mxu0 0.0
      %129 = vmatpush.msra.mxu0 0.0
      %130 = vmatpush.msra.mxu0 0.0
      %131 = vmatpush.msra.mxu0 0.0
      %132 = vmatpush.msra.mxu0 0.0
      %133 = vmatpush.msra.mxu0 0.0
      %134 = vmatpush.msra.mxu0 0.0
      %135 = vmatpush.msra.mxu0 0.0
      %136 = vmatpush.msra.mxu0 0.0
      %137 = vmatpush.msra.mxu0 %v117
      %138 = vmatpush.msra.mxu0 %v116
      %139 = vmatpush.msra.mxu0 %v115
      %140 = vmatpush.msra.mxu0 %v114
      %141 = vmatmul.f32.gmra.mxu0 %v123
      %v142 = vpop.f32.mrf.mxu0
      %v143 = vadd.f32 %v120, %v142
      %144 = vdwg.mxu0
      %145 = vst [vmem:[#allocation9] sm:$0xff] %v143
    $region41: #{tpu_custom_call.1} parent=1 // pred_fallthru
      _
    // Predicated region
    $region42: #{tpu_custom_call.1} parent=1 // pred_check
      _
    $region43: #{tpu_custom_call.1} parent=1 // pred_check_branch
      %147 = sbr.rel (0) target = $region45
    $region44: #{tpu_custom_call.1} parent=1 // pred_region
      %149 = vsyncadd [#allocation5], 0
      %s151 = sshll.u32 [#allocation9], 4
      %s152 = int_to_ptr.vmem [resolvable:$true] %s151
      %s153 = sshll.u32 %s5, 4
      %s154 = int_to_ptr.hbm [resolvable:$true] %s153
      %156 = dma.vmem_to_hbm [thread:$0]  %s152, 128, %s154, [#allocation5]
    $region45: #{tpu_custom_call.1} parent=1 // pred_fallthru
      _
    // Predicated region
    $region46: #{tpu_custom_call.1} parent=1 // pred_check
      _
    $region47: #{tpu_custom_call.1} parent=1 // pred_check_branch
      %158 = sbr.rel (0) target = $region49
    $region48: #{tpu_custom_call.1} parent=1 // pred_region
      %160 = dma.done [#allocation5], 128
    $region49: #{tpu_custom_call.1} parent=1 // pred_fallthru
      _
    %161 = vsyncpa [#allocation4], 1
    %162 = vsyncpa [#allocation7], 1
    %163 = vsyncpa [#allocation5], 1

</llo_original>
